<compile_context>
chip_gen: v5e
topology: v5e:2x2
jax: 0.10.0
libtpu: 0.0.40
codegen_flags: <defaults>
</compile_context>

<pallas_src>
import jax
import jax.numpy as jnp
from jax.experimental import pallas as pl
from jax.experimental.pallas import tpu as pltpu


def _round_up(x: int, m: int) -> int:
    return ((x + m - 1) // m) * m


def mlp_kernel(x_ref, w1_ref, b1_ref, w2_ref, b2_ref, o_ref):
    # Layer 1: X @ W1 + b1, ReLU (== torch.max(x, zeros)).
    h = jnp.dot(x_ref[...], w1_ref[...], preferred_element_type=jnp.float32)
    h = jnp.maximum(h + b1_ref[...], 0.0)       # b1 is (1, Hp) -> broadcasts over rows
    # Layer 2: H @ W2 + b2.
    out = jnp.dot(h, w2_ref[...], preferred_element_type=jnp.float32) + b2_ref[...]
    o_ref[...] = out.astype(o_ref.dtype)


def mlp_forward(x, w1, b1, w2, b2, *, tm_max: int = 512):
    """Forward pass matching the PyTorch module: x flattened to (-1, num_inputs)."""
    num_inputs, num_hiddens = w1.shape
    num_outputs = w2.shape[1]

    x2d = x.reshape((-1, num_inputs))
    batch = x2d.shape[0]

    # ---- Static lane-dense padding of hidden / output dims (exact: zeros). ----
    h_pad = _round_up(num_hiddens, 128)
    o_pad = _round_up(num_outputs, 128)
    w1_p = jnp.pad(w1, ((0, 0), (0, h_pad - num_hiddens)))
    b1_p = jnp.pad(b1.reshape((1, num_hiddens)), ((0, 0), (0, h_pad - num_hiddens)))
    w2_p = jnp.pad(w2, ((0, h_pad - num_hiddens), (0, o_pad - num_outputs)))
    b2_p = jnp.pad(b2.reshape((1, num_outputs)), ((0, 0), (0, o_pad - num_outputs)))

    # ---- Batch tiling: TM a multiple of 8, capped so tiles stay small in VMEM. ----
    tm = min(tm_max, _round_up(batch, 8))
    batch_p = _round_up(batch, tm)
    if batch_p != batch:
        x2d = jnp.pad(x2d, ((0, batch_p - batch), (0, 0)))
    grid = (batch_p // tm,)

    out = pl.pallas_call(
        mlp_kernel,
        out_shape=jax.ShapeDtypeStruct((batch_p, o_pad), x2d.dtype),
        grid=grid,
        in_specs=[
            # X: tiled over batch.
            pl.BlockSpec((tm, num_inputs), lambda i: (i, 0)),
            # Weights / biases: constant index_map -> VMEM-resident across steps.
            pl.BlockSpec((num_inputs, h_pad), lambda i: (0, 0)),
            pl.BlockSpec((1, h_pad), lambda i: (0, 0)),
            pl.BlockSpec((h_pad, o_pad), lambda i: (0, 0)),
            pl.BlockSpec((1, o_pad), lambda i: (0, 0)),
        ],
        out_specs=pl.BlockSpec((tm, o_pad), lambda i: (i, 0)),
        compiler_params=pltpu.CompilerParams(
            dimension_semantics=("parallel",),
            vmem_limit_bytes=32 * 1024 * 1024,
        ),
    )(x2d, w1_p, b1_p, w2_p, b2_p)

    # Slice padded rows / output lanes back to the logical result.
    return out[:batch, :num_outputs]


if __name__ == "__main__":
    # Small shapes consistent with the module's forward:
    #   X: (2, 4, 16, 16) NCHW -> flattened to (2, 1024)
    #   num_inputs=1024, num_hiddens=32, num_outputs=10, sigma=0.01
    key = jax.random.PRNGKey(0)
    kx, kw1, kw2 = jax.random.split(key, 3)

    batch, C, H, W = 2, 4, 16, 16
    num_inputs = C * H * W
    num_hiddens = 32
    num_outputs = 10
    sigma = 0.01

    x = jax.random.normal(kx, (batch, C, H, W), dtype=jnp.float32)
    W1 = jax.random.normal(kw1, (num_inputs, num_hiddens), dtype=jnp.float32) * sigma
    b1 = jnp.zeros((num_hiddens,), dtype=jnp.float32)
    W2 = jax.random.normal(kw2, (num_hiddens, num_outputs), dtype=jnp.float32) * sigma
    b2 = jnp.zeros((num_outputs,), dtype=jnp.float32)

    out = mlp_forward(x, W1, b1, W2, b2)
    out = jax.block_until_ready(out)

    # Reference check in plain JAX (same math as the PyTorch module).
    x2d = x.reshape((-1, num_inputs))
    ref = jnp.maximum(x2d @ W1 + b1, 0.0) @ W2 + b2
    assert out.shape == (batch, num_outputs)
    assert jnp.allclose(out, ref, atol=1e-5, rtol=1e-5)

    print("KERNEL_OK")
</pallas_src>

<mosaic_0001>
module attributes {stable_mosaic.version = 11 : i64} {
  func.func @mlp_kernel(%arg0: i32, %arg1: memref<8x1024xf32, #tpu.memory_space<vmem>>, %arg2: memref<1024x128xf32, #tpu.memory_space<vmem>>, %arg3: memref<1x128xf32, #tpu.memory_space<vmem>>, %arg4: memref<128x128xf32, #tpu.memory_space<vmem>>, %arg5: memref<1x128xf32, #tpu.memory_space<vmem>>, %arg6: memref<8x128xf32, #tpu.memory_space<vmem>>) attributes {dimension_semantics = [#tpu.dimension_semantics<parallel>], iteration_bounds = array<i64: 1>, scalar_prefetch = 0 : i64, scratch_operands = 0 : i64, tpu.core_type = #tpu.core_type<tc>, window_params = [{transform_indices = @transform_0, window_bounds = array<i64: 8, 1024>}, {pipeline_mode = #tpu.pipeline_mode<synchronous>, transform_indices = @transform_1, window_bounds = array<i64: 1024, 128>}, {pipeline_mode = #tpu.pipeline_mode<synchronous>, transform_indices = @transform_2, window_bounds = array<i64: 1, 128>}, {pipeline_mode = #tpu.pipeline_mode<synchronous>, transform_indices = @transform_3, window_bounds = array<i64: 128, 128>}, {pipeline_mode = #tpu.pipeline_mode<synchronous>, transform_indices = @transform_4, window_bounds = array<i64: 1, 128>}, {transform_indices = @transform_5, window_bounds = array<i64: 8, 128>}]} {
    %c0 = arith.constant 0 : index
    %c0_0 = arith.constant 0 : index
    %0 = vector.load %arg1[%c0, %c0_0] : memref<8x1024xf32, #tpu.memory_space<vmem>>, vector<8x1024xf32>
    %c0_1 = arith.constant 0 : index
    %c0_2 = arith.constant 0 : index
    %1 = vector.load %arg2[%c0_1, %c0_2] : memref<1024x128xf32, #tpu.memory_space<vmem>>, vector<1024x128xf32>
    %cst = arith.constant dense<0.000000e+00> : vector<8x128xf32>
    %2 = tpu.matmul %0, %1, %cst {dimension_numbers = #tpu.dot_dimension_numbers<[1], [0], [0], [1], [0, 0, 1, 1], [], []>} : vector<8x1024xf32>, vector<1024x128xf32>, vector<8x128xf32> -> vector<8x128xf32>
    %c0_3 = arith.constant 0 : index
    %c0_4 = arith.constant 0 : index
    %3 = vector.load %arg3[%c0_3, %c0_4] : memref<1x128xf32, #tpu.memory_space<vmem>>, vector<1x128xf32>
    %4 = vector.broadcast %3 : vector<1x128xf32> to vector<8x128xf32>
    %5 = arith.addf %2, %4 : vector<8x128xf32>
    %cst_5 = arith.constant 0.000000e+00 : f32
    %6 = vector.broadcast %cst_5 : f32 to vector<8x128xf32>
    %7 = arith.maximumf %5, %6 : vector<8x128xf32>
    %c0_6 = arith.constant 0 : index
    %c0_7 = arith.constant 0 : index
    %8 = vector.load %arg4[%c0_6, %c0_7] : memref<128x128xf32, #tpu.memory_space<vmem>>, vector<128x128xf32>
    %cst_8 = arith.constant dense<0.000000e+00> : vector<8x128xf32>
    %9 = tpu.matmul %7, %8, %cst_8 {dimension_numbers = #tpu.dot_dimension_numbers<[1], [0], [0], [1], [0, 0, 1, 1], [], []>} : vector<8x128xf32>, vector<128x128xf32>, vector<8x128xf32> -> vector<8x128xf32>
    %c0_9 = arith.constant 0 : index
    %c0_10 = arith.constant 0 : index
    %10 = vector.load %arg5[%c0_9, %c0_10] : memref<1x128xf32, #tpu.memory_space<vmem>>, vector<1x128xf32>
    %11 = vector.broadcast %10 : vector<1x128xf32> to vector<8x128xf32>
    %12 = arith.addf %9, %11 : vector<8x128xf32>
    %c0_11 = arith.constant 0 : index
    %c0_12 = arith.constant 0 : index
    %13 = vector.load %arg6[%c0_11, %c0_12] : memref<8x128xf32, #tpu.memory_space<vmem>>, vector<8x128xf32>
    tpu.vector_store %arg6[%c0_11, %c0_12], %12 {strides = array<i32>} : memref<8x128xf32, #tpu.memory_space<vmem>>, vector<8x128xf32>,
    return
  }
  func.func @transform_0(%arg0: i32) -> (i32, i32) {
    %c0_i32 = arith.constant 0 : i32
    %c0_i32_0 = arith.constant 0 : i32
    return %arg0, %c0_i32 : i32, i32
  }
  func.func @transform_1(%arg0: i32) -> (i32, i32) {
    %c0_i32 = arith.constant 0 : i32
    %c0_i32_0 = arith.constant 0 : i32
    %c0_i32_1 = arith.constant 0 : i32
    return %c0_i32, %c0_i32_0 : i32, i32
  }
  func.func @transform_2(%arg0: i32) -> (i32, i32) {
    %c0_i32 = arith.constant 0 : i32
    %c0_i32_0 = arith.constant 0 : i32
    %c0_i32_1 = arith.constant 0 : i32
    return %c0_i32, %c0_i32_0 : i32, i32
  }
  func.func @transform_3(%arg0: i32) -> (i32, i32) {
    %c0_i32 = arith.constant 0 : i32
    %c0_i32_0 = arith.constant 0 : i32
    %c0_i32_1 = arith.constant 0 : i32
    return %c0_i32, %c0_i32_0 : i32, i32
  }
  func.func @transform_4(%arg0: i32) -> (i32, i32) {
    %c0_i32 = arith.constant 0 : i32
    %c0_i32_0 = arith.constant 0 : i32
    %c0_i32_1 = arith.constant 0 : i32
    return %c0_i32, %c0_i32_0 : i32, i32
  }
  func.func @transform_5(%arg0: i32) -> (i32, i32) {
    %c0_i32 = arith.constant 0 : i32
    %c0_i32_0 = arith.constant 0 : i32
    return %arg0, %c0_i32 : i32, i32
  }
}

</mosaic_0001>

<llo_original>
// kernel: tpu_custom_call.1
$region0: #{tpu_custom_call.1}
  #allocation0 [shape = 'u32[]', space=smem, size = 0x4, offset = 0x4, fixed_abs, tag = 'smem constant byte address 0x4 - core index']
  #allocation1 [shape = 'u32[72,128]{1,0:T(1,128)}', space=vmem, size = 0x9000, scoped, tag = 'internal scratch']
  %s0 = inlined_call_operand.hbm [shape: f32[8,1024], index: 0, kind: input, shape index: {}]
  %s1 = inlined_call_operand.hbm [shape: f32[1024,128], index: 1, kind: input, shape index: {}]
  %s2 = inlined_call_operand.vmem [shape: f32[1,128], index: 2, kind: input, shape index: {}]
  %s3 = inlined_call_operand.hbm [shape: f32[128,128], index: 3, kind: input, shape index: {}]
  %s4 = inlined_call_operand.vmem [shape: f32[1,128], index: 4, kind: input, shape index: {}]
  %s5 = inlined_call_operand.hbm [shape: f32[8,128], index: 5, kind: output, shape index: {}]
  %s6 = sld [smem:[#allocation0]]
  $region42: #{tpu_custom_call.1} parent=0
    _
  %s8 = ssub.s32 1, %s6
  %s9 = scalar_select 0, %s8, %s6
  $region1: #{tpu_custom_call.1} parent=0
    #allocation2 [shape = 'u8[32768]{0}', space=vmem, size = 0x8000, scoped, tag = 'input window, operand 0, single buffered']
    #allocation3 [shape = 's32[1]{0}', space=sflag, size = 0x4, scoped, tag = 'scoped memory for tpu_custom_call.1']
    #allocation4 [shape = 's32[1]{0}', space=sflag, size = 0x4, scoped, tag = 'scoped memory for tpu_custom_call.1']
    #allocation5 [shape = 'u8[524288]{0}', space=vmem, size = 0x80000, scoped, tag = 'input window, operand 1, single buffered']
    #allocation6 [shape = 's32[1]{0}', space=sflag, size = 0x4, scoped, tag = 'scoped memory for tpu_custom_call.1']
    #allocation7 [shape = 'u8[65536]{0}', space=vmem, size = 0x10000, scoped, tag = 'input window, operand 3, single buffered']
    #allocation8 [shape = 'u8[4096]{0}', space=vmem, size = 0x1000, scoped, tag = 'output window, operand 0, single buffered']
    %10 = vsyncpa [#allocation3], 0
    %11 = vsyncpa [#allocation6], 0
    %12 = vsyncpa [#allocation4], 0
    // Predicated region
    $region2: #{tpu_custom_call.1} parent=1 // pred_check
      _
    $region3: #{tpu_custom_call.1} parent=1 // pred_check_branch
      %14 = sbr.rel (0) target = $region5
    $region4: #{tpu_custom_call.1} parent=1 // pred_region
      %16 = vsyncadd [#allocation3], 0
      %s18 = sshll.u32 %s0, 4
      %s19 = int_to_ptr.hbm [resolvable:$true] %s18
      %s20 = sshll.u32 [#allocation2], 4
      %s21 = int_to_ptr.vmem [resolvable:$true] %s20
      %23 = dma.hbm_to_vmem [thread:$0]  %s19, 1024, %s21, [#allocation3]
    $region5: #{tpu_custom_call.1} parent=1 // pred_fallthru
      _
    // Predicated region
    $region6: #{tpu_custom_call.1} parent=1 // pred_check
      _
    $region7: #{tpu_custom_call.1} parent=1 // pred_check_branch
      %25 = sbr.rel (0) target = $region9
    $region8: #{tpu_custom_call.1} parent=1 // pred_region
      %27 = vsyncadd [#allocation6], 0
      %s28 = sshll.u32 %s1, 4
      %s29 = int_to_ptr.hbm [resolvable:$true] %s28
      %s30 = sshll.u32 [#allocation5], 4
      %s31 = int_to_ptr.vmem [resolvable:$true] %s30
      %36 = dma.hbm_to_vmem [thread:$0]  %s29, 16384, %s31, [#allocation6], 128, 128, 8
    $region9: #{tpu_custom_call.1} parent=1 // pred_fallthru
      _
    // Predicated region
    $region10: #{tpu_custom_call.1} parent=1 // pred_check
      _
    $region11: #{tpu_custom_call.1} parent=1 // pred_check_branch
      %38 = sbr.rel (0) target = $region13
    $region12: #{tpu_custom_call.1} parent=1 // pred_region
      _
    $region13: #{tpu_custom_call.1} parent=1 // pred_fallthru
      _
    // Predicated region
    $region14: #{tpu_custom_call.1} parent=1 // pred_check
      _
    $region15: #{tpu_custom_call.1} parent=1 // pred_check_branch
      %40 = sbr.rel (0) target = $region17
    $region16: #{tpu_custom_call.1} parent=1 // pred_region
      %42 = vsyncadd [#allocation6], 0
      %s43 = sshll.u32 %s3, 4
      %s44 = int_to_ptr.hbm [resolvable:$true] %s43
      %s45 = sshll.u32 [#allocation7], 4
      %s46 = int_to_ptr.vmem [resolvable:$true] %s45
      %51 = dma.hbm_to_vmem [thread:$0]  %s44, 2048, %s46, [#allocation6], 128, 128, 8
    $region17: #{tpu_custom_call.1} parent=1 // pred_fallthru
      _
    // Predicated region
    $region18: #{tpu_custom_call.1} parent=1 // pred_check
      _
    $region19: #{tpu_custom_call.1} parent=1 // pred_check_branch
      %53 = sbr.rel (0) target = $region21
    $region20: #{tpu_custom_call.1} parent=1 // pred_region
      _
    $region21: #{tpu_custom_call.1} parent=1 // pred_fallthru
      _
    // Predicated region
    $region22: #{tpu_custom_call.1} parent=1 // pred_check
      _
    $region23: #{tpu_custom_call.1} parent=1 // pred_check_branch
      %55 = sbr.rel (0) target = $region25
    $region24: #{tpu_custom_call.1} parent=1 // pred_region
      %57 = dma.done [#allocation3], 1024
    $region25: #{tpu_custom_call.1} parent=1 // pred_fallthru
      _
    // Predicated region
    $region26: #{tpu_custom_call.1} parent=1 // pred_check
      _
    $region27: #{tpu_custom_call.1} parent=1 // pred_check_branch
      %59 = sbr.rel (0) target = $region29
    $region28: #{tpu_custom_call.1} parent=1 // pred_region
      %61 = dma.done [#allocation6], 16384
    $region29: #{tpu_custom_call.1} parent=1 // pred_fallthru
      _
    // Predicated region
    $region30: #{tpu_custom_call.1} parent=1 // pred_check
      _
    $region31: #{tpu_custom_call.1} parent=1 // pred_check_branch
      %63 = sbr.rel (0) target = $region33
    $region32: #{tpu_custom_call.1} parent=1 // pred_region
      %65 = dma.done [#allocation6], 2048
    $region33: #{tpu_custom_call.1} parent=1 // pred_fallthru
      _
    %v66 = vld [vmem:[#allocation2] sm:$0xff]
    %v67 = vld [vmem:[#allocation2 + $0x8] sm:$0xff]
    %v68 = vld [vmem:[#allocation2 + $0x10] sm:$0xff]
    %v69 = vld [vmem:[#allocation2 + $0x18] sm:$0xff]
    %v70 = vld [vmem:[#allocation2 + $0x20] sm:$0xff]
    %v71 = vld [vmem:[#allocation2 + $0x28] sm:$0xff]
    %v72 = vld [vmem:[#allocation2 + $0x30] sm:$0xff]
    %v73 = vld [vmem:[#allocation2 + $0x38] sm:$0xff]
    %v74 = vld [vmem:[#allocation5] sm:$0xff]
    %v75 = vld [vmem:[#allocation5 + $0x8] sm:$0xff]
    %v76 = vld [vmem:[#allocation5 + $0x10] sm:$0xff]
    %v77 = vld [vmem:[#allocation5 + $0x18] sm:$0xff]
    %v78 = vld [vmem:[#allocation5 + $0x20] sm:$0xff]
    %v79 = vld [vmem:[#allocation5 + $0x28] sm:$0xff]
    %v80 = vld [vmem:[#allocation5 + $0x30] sm:$0xff]
    %v81 = vld [vmem:[#allocation5 + $0x38] sm:$0xff]
    %v82 = vld [vmem:[#allocation5 + $0x40] sm:$0xff]
    %v83 = vld [vmem:[#allocation5 + $0x48] sm:$0xff]
    %v84 = vld [vmem:[#allocation5 + $0x50] sm:$0xff]
    %v85 = vld [vmem:[#allocation5 + $0x58] sm:$0xff]
    %v86 = vld [vmem:[#allocation5 + $0x60] sm:$0xff]
    %v87 = vld [vmem:[#allocation5 + $0x68] sm:$0xff]
    %v88 = vld [vmem:[#allocation5 + $0x70] sm:$0xff]
    %v89 = vld [vmem:[#allocation5 + $0x78] sm:$0xff]
    %v90 = vld [vmem:[#allocation5 + $0x80] sm:$0xff]
    %v91 = vld [vmem:[#allocation5 + $0x88] sm:$0xff]
    %v92 = vld [vmem:[#allocation5 + $0x90] sm:$0xff]
    %v93 = vld [vmem:[#allocation5 + $0x98] sm:$0xff]
    %v94 = vld [vmem:[#allocation5 + $0xa0] sm:$0xff]
    %v95 = vld [vmem:[#allocation5 + $0xa8] sm:$0xff]
    %v96 = vld [vmem:[#allocation5 + $0xb0] sm:$0xff]
    %v97 = vld [vmem:[#allocation5 + $0xb8] sm:$0xff]
    %v98 = vld [vmem:[#allocation5 + $0xc0] sm:$0xff]
    %v99 = vld [vmem:[#allocation5 + $0xc8] sm:$0xff]
    %v100 = vld [vmem:[#allocation5 + $0xd0] sm:$0xff]
    %v101 = vld [vmem:[#allocation5 + $0xd8] sm:$0xff]
    %v102 = vld [vmem:[#allocation5 + $0xe0] sm:$0xff]
    %v103 = vld [vmem:[#allocation5 + $0xe8] sm:$0xff]
    %v104 = vld [vmem:[#allocation5 + $0xf0] sm:$0xff]
    %v105 = vld [vmem:[#allocation5 + $0xf8] sm:$0xff]
    %v106 = vld [vmem:[#allocation5 + $0x100] sm:$0xff]
    %v107 = vld [vmem:[#allocation5 + $0x108] sm:$0xff]
    %v108 = vld [vmem:[#allocation5 + $0x110] sm:$0xff]
    %v109 = vld [vmem:[#allocation5 + $0x118] sm:$0xff]
    %v110 = vld [vmem:[#allocation5 + $0x120] sm:$0xff]
    %v111 = vld [vmem:[#allocation5 + $0x128] sm:$0xff]
    %v112 = vld [vmem:[#allocation5 + $0x130] sm:$0xff]
    %v113 = vld [vmem:[#allocation5 + $0x138] sm:$0xff]
    %v114 = vld [vmem:[#allocation5 + $0x140] sm:$0xff]
    %v115 = vld [vmem:[#allocation5 + $0x148] sm:$0xff]
    %v116 = vld [vmem:[#allocation5 + $0x150] sm:$0xff]
    %v117 = vld [vmem:[#allocation5 + $0x158] sm:$0xff]
    %v118 = vld [vmem:[#allocation5 + $0x160] sm:$0xff]
    %v119 = vld [vmem:[#allocation5 + $0x168] sm:$0xff]
    %v120 = vld [vmem:[#allocation5 + $0x170] sm:$0xff]
    %v121 = vld [vmem:[#allocation5 + $0x178] sm:$0xff]
    %v122 = vld [vmem:[#allocation5 + $0x180] sm:$0xff]
    %v123 = vld [vmem:[#allocation5 + $0x188] sm:$0xff]
    %v124 = vld [vmem:[#allocation5 + $0x190] sm:$0xff]
    %v125 = vld [vmem:[#allocation5 + $0x198] sm:$0xff]
    %v126 = vld [vmem:[#allocation5 + $0x1a0] sm:$0xff]
    %v127 = vld [vmem:[#allocation5 + $0x1a8] sm:$0xff]
    %v128 = vld [vmem:[#allocation5 + $0x1b0] sm:$0xff]
    %v129 = vld [vmem:[#allocation5 + $0x1b8] sm:$0xff]
    %v130 = vld [vmem:[#allocation5 + $0x1c0] sm:$0xff]
    %v131 = vld [vmem:[#allocation5 + $0x1c8] sm:$0xff]
    %v132 = vld [vmem:[#allocation5 + $0x1d0] sm:$0xff]
    %v133 = vld [vmem:[#allocation5 + $0x1d8] sm:$0xff]
    %v134 = vld [vmem:[#allocation5 + $0x1e0] sm:$0xff]
    %v135 = vld [vmem:[#allocation5 + $0x1e8] sm:$0xff]
    %v136 = vld [vmem:[#allocation5 + $0x1f0] sm:$0xff]
    %v137 = vld [vmem:[#allocation5 + $0x1f8] sm:$0xff]
    %v138 = vld [vmem:[#allocation5 + $0x200] sm:$0xff]
    %v139 = vld [vmem:[#allocation5 + $0x208] sm:$0xff]
    %v140 = vld [vmem:[#allocation5 + $0x210] sm:$0xff]
    %v141 = vld [vmem:[#allocation5 + $0x218] sm:$0xff]
    %v142 = vld [vmem:[#allocation5 + $0x220] sm:$0xff]
    %v143 = vld [vmem:[#allocation5 + $0x228] sm:$0xff]
    %v144 = vld [vmem:[#allocation5 + $0x230] sm:$0xff]
    %v145 = vld [vmem:[#allocation5 + $0x238] sm:$0xff]
    %v146 = vld [vmem:[#allocation5 + $0x240] sm:$0xff]
    %v147 = vld [vmem:[#allocation5 + $0x248] sm:$0xff]
    %v148 = vld [vmem:[#allocation5 + $0x250] sm:$0xff]
    %v149 = vld [vmem:[#allocation5 + $0x258] sm:$0xff]
    %v150 = vld [vmem:[#allocation5 + $0x260] sm:$0xff]
    %v151 = vld [vmem:[#allocation5 + $0x268] sm:$0xff]
    %v152 = vld [vmem:[#allocation5 + $0x270] sm:$0xff]
    %v153 = vld [vmem:[#allocation5 + $0x278] sm:$0xff]
    %v154 = vld [vmem:[#allocation5 + $0x280] sm:$0xff]
    %v155 = vld [vmem:[#allocation5 + $0x288] sm:$0xff]
    %v156 = vld [vmem:[#allocation5 + $0x290] sm:$0xff]
    %v157 = vld [vmem:[#allocation5 + $0x298] sm:$0xff]
    %v158 = vld [vmem:[#allocation5 + $0x2a0] sm:$0xff]
    %v159 = vld [vmem:[#allocation5 + $0x2a8] sm:$0xff]
    %v160 = vld [vmem:[#allocation5 + $0x2b0] sm:$0xff]
    %v161 = vld [vmem:[#allocation5 + $0x2b8] sm:$0xff]
    %v162 = vld [vmem:[#allocation5 + $0x2c0] sm:$0xff]
    %v163 = vld [vmem:[#allocation5 + $0x2c8] sm:$0xff]
    %v164 = vld [vmem:[#allocation5 + $0x2d0] sm:$0xff]
    %v165 = vld [vmem:[#allocation5 + $0x2d8] sm:$0xff]
    %v166 = vld [vmem:[#allocation5 + $0x2e0] sm:$0xff]
    %v167 = vld [vmem:[#allocation5 + $0x2e8] sm:$0xff]
    %v168 = vld [vmem:[#allocation5 + $0x2f0] sm:$0xff]
    %v169 = vld [vmem:[#allocation5 + $0x2f8] sm:$0xff]
    %v170 = vld [vmem:[#allocation5 + $0x300] sm:$0xff]
    %v171 = vld [vmem:[#allocation5 + $0x308] sm:$0xff]
    %v172 = vld [vmem:[#allocation5 + $0x310] sm:$0xff]
    %v173 = vld [vmem:[#allocation5 + $0x318] sm:$0xff]
    %v174 = vld [vmem:[#allocation5 + $0x320] sm:$0xff]
    %v175 = vld [vmem:[#allocation5 + $0x328] sm:$0xff]
    %v176 = vld [vmem:[#allocation5 + $0x330] sm:$0xff]
    %v177 = vld [vmem:[#allocation5 + $0x338] sm:$0xff]
    %v178 = vld [vmem:[#allocation5 + $0x340] sm:$0xff]
    %v179 = vld [vmem:[#allocation5 + $0x348] sm:$0xff]
    %v180 = vld [vmem:[#allocation5 + $0x350] sm:$0xff]
    %v181 = vld [vmem:[#allocation5 + $0x358] sm:$0xff]
    %v182 = vld [vmem:[#allocation5 + $0x360] sm:$0xff]
    %v183 = vld [vmem:[#allocation5 + $0x368] sm:$0xff]
    %v184 = vld [vmem:[#allocation5 + $0x370] sm:$0xff]
    %v185 = vld [vmem:[#allocation5 + $0x378] sm:$0xff]
    %v186 = vld [vmem:[#allocation5 + $0x380] sm:$0xff]
    %v187 = vld [vmem:[#allocation5 + $0x388] sm:$0xff]
    %v188 = vld [vmem:[#allocation5 + $0x390] sm:$0xff]
    %v189 = vld [vmem:[#allocation5 + $0x398] sm:$0xff]
    %v190 = vld [vmem:[#allocation5 + $0x3a0] sm:$0xff]
    %v191 = vld [vmem:[#allocation5 + $0x3a8] sm:$0xff]
    %v192 = vld [vmem:[#allocation5 + $0x3b0] sm:$0xff]
    %v193 = vld [vmem:[#allocation5 + $0x3b8] sm:$0xff]
    %v194 = vld [vmem:[#allocation5 + $0x3c0] sm:$0xff]
    %v195 = vld [vmem:[#allocation5 + $0x3c8] sm:$0xff]
    %v196 = vld [vmem:[#allocation5 + $0x3d0] sm:$0xff]
    %v197 = vld [vmem:[#allocation5 + $0x3d8] sm:$0xff]
    %v198 = vld [vmem:[#allocation5 + $0x3e0] sm:$0xff]
    %v199 = vld [vmem:[#allocation5 + $0x3e8] sm:$0xff]
    %v200 = vld [vmem:[#allocation5 + $0x3f0] sm:$0xff]
    %v201 = vld [vmem:[#allocation5 + $0x3f8] sm:$0xff]
    %v202 = vld [vmem:[%s2] sm:$0x1]
    %v204 = vperm.slane %v202, 0
    %206 = vmatpush.msra.mxu0 %v89
    %207 = vmatpush.msra.mxu0 %v88
    %208 = vmatpush.msra.mxu0 %v87
    %209 = vmatpush.msra.mxu0 %v86
    %210 = vmatpush.msra.mxu0 %v85
    %211 = vmatpush.msra.mxu0 %v84
    %212 = vmatpush.msra.mxu0 %v83
    %213 = vmatpush.msra.mxu0 %v82
    %214 = vmatpush.msra.mxu0 %v81
    %215 = vmatpush.msra.mxu0 %v80
    %216 = vmatpush.msra.mxu0 %v79
    %217 = vmatpush.msra.mxu0 %v78
    %218 = vmatpush.msra.mxu0 %v77
    %219 = vmatpush.msra.mxu0 %v76
    %220 = vmatpush.msra.mxu0 %v75
    %221 = vmatpush.msra.mxu0 %v74
    %222 = vmatmul.f32.gmra.mxu0 %v66
    %v223 = vpop.f32.mrf.mxu0
    %v224 = vadd.f32 %v204, %v223
    %225 = vdwg.mxu0
    %226 = vmatpush.msra.mxu0 %v105
    %227 = vmatpush.msra.mxu0 %v104
    %228 = vmatpush.msra.mxu0 %v103
    %229 = vmatpush.msra.mxu0 %v102
    %230 = vmatpush.msra.mxu0 %v101
    %231 = vmatpush.msra.mxu0 %v100
    %232 = vmatpush.msra.mxu0 %v99
    %233 = vmatpush.msra.mxu0 %v98
    %234 = vmatpush.msra.mxu0 %v97
    %235 = vmatpush.msra.mxu0 %v96
    %236 = vmatpush.msra.mxu0 %v95
    %237 = vmatpush.msra.mxu0 %v94
    %238 = vmatpush.msra.mxu0 %v93
    %239 = vmatpush.msra.mxu0 %v92
    %240 = vmatpush.msra.mxu0 %v91
    %241 = vmatpush.msra.mxu0 %v90
    %242 = vmatmul.f32.gmra.mxu0 %v67
    %v243 = vpop.f32.mrf.mxu0
    %v244 = vadd.f32 %v224, %v243
    %245 = vdwg.mxu0
    %246 = vmatpush.msra.mxu0 %v121
    %247 = vmatpush.msra.mxu0 %v120
    %248 = vmatpush.msra.mxu0 %v119
    %249 = vmatpush.msra.mxu0 %v118
    %250 = vmatpush.msra.mxu0 %v117
    %251 = vmatpush.msra.mxu0 %v116
    %252 = vmatpush.msra.mxu0 %v115
    %253 = vmatpush.msra.mxu0 %v114
    %254 = vmatpush.msra.mxu0 %v113
    %255 = vmatpush.msra.mxu0 %v112
    %256 = vmatpush.msra.mxu0 %v111
    %257 = vmatpush.msra.mxu0 %v110
    %258 = vmatpush.msra.mxu0 %v109
    %259 = vmatpush.msra.mxu0 %v108
    %260 = vmatpush.msra.mxu0 %v107
    %261 = vmatpush.msra.mxu0 %v106
    %262 = vmatmul.f32.gmra.mxu0 %v68
    %v263 = vpop.f32.mrf.mxu0
    %v264 = vadd.f32 %v244, %v263
    %265 = vdwg.mxu0
    %266 = vmatpush.msra.mxu0 %v137
    %267 = vmatpush.msra.mxu0 %v136
    %268 = vmatpush.msra.mxu0 %v135
    %269 = vmatpush.msra.mxu0 %v134
    %270 = vmatpush.msra.mxu0 %v133
    %271 = vmatpush.msra.mxu0 %v132
    %272 = vmatpush.msra.mxu0 %v131
    %273 = vmatpush.msra.mxu0 %v130
    %274 = vmatpush.msra.mxu0 %v129
    %275 = vmatpush.msra.mxu0 %v128
    %276 = vmatpush.msra.mxu0 %v127
    %277 = vmatpush.msra.mxu0 %v126
    %278 = vmatpush.msra.mxu0 %v125
    %279 = vmatpush.msra.mxu0 %v124
    %280 = vmatpush.msra.mxu0 %v123
    %281 = vmatpush.msra.mxu0 %v122
    %282 = vmatmul.f32.gmra.mxu0 %v69
    %v283 = vpop.f32.mrf.mxu0
    %v284 = vadd.f32 %v264, %v283
    %285 = vdwg.mxu0
    %286 = vmatpush.msra.mxu0 %v153
    %287 = vmatpush.msra.mxu0 %v152
    %288 = vmatpush.msra.mxu0 %v151
    %289 = vmatpush.msra.mxu0 %v150
    %290 = vmatpush.msra.mxu0 %v149
    %291 = vmatpush.msra.mxu0 %v148
    %292 = vmatpush.msra.mxu0 %v147
    %293 = vmatpush.msra.mxu0 %v146
    %294 = vmatpush.msra.mxu0 %v145
    %295 = vmatpush.msra.mxu0 %v144
    %296 = vmatpush.msra.mxu0 %v143
    %297 = vmatpush.msra.mxu0 %v142
    %298 = vmatpush.msra.mxu0 %v141
    %299 = vmatpush.msra.mxu0 %v140
    %300 = vmatpush.msra.mxu0 %v139
    %301 = vmatpush.msra.mxu0 %v138
    %302 = vmatmul.f32.gmra.mxu0 %v70
    %v303 = vpop.f32.mrf.mxu0
    %v304 = vadd.f32 %v284, %v303
    %305 = vdwg.mxu0
    %306 = vmatpush.msra.mxu0 %v169
    %307 = vmatpush.msra.mxu0 %v168
    %308 = vmatpush.msra.mxu0 %v167
    %309 = vmatpush.msra.mxu0 %v166
    %310 = vmatpush.msra.mxu0 %v165
    %311 = vmatpush.msra.mxu0 %v164
    %312 = vmatpush.msra.mxu0 %v163
    %313 = vmatpush.msra.mxu0 %v162
    %314 = vmatpush.msra.mxu0 %v161
    %315 = vmatpush.msra.mxu0 %v160
    %316 = vmatpush.msra.mxu0 %v159
    %317 = vmatpush.msra.mxu0 %v158
    %318 = vmatpush.msra.mxu0 %v157
    %319 = vmatpush.msra.mxu0 %v156
    %320 = vmatpush.msra.mxu0 %v155
    %321 = vmatpush.msra.mxu0 %v154
    %322 = vmatmul.f32.gmra.mxu0 %v71
    %v323 = vpop.f32.mrf.mxu0
    %v324 = vadd.f32 %v304, %v323
    %325 = vdwg.mxu0
    %326 = vmatpush.msra.mxu0 %v185
    %327 = vmatpush.msra.mxu0 %v184
    %328 = vmatpush.msra.mxu0 %v183
    %329 = vmatpush.msra.mxu0 %v182
    %330 = vmatpush.msra.mxu0 %v181
    %331 = vmatpush.msra.mxu0 %v180
    %332 = vmatpush.msra.mxu0 %v179
    %333 = vmatpush.msra.mxu0 %v178
    %334 = vmatpush.msra.mxu0 %v177
    %335 = vmatpush.msra.mxu0 %v176
    %336 = vmatpush.msra.mxu0 %v175
    %337 = vmatpush.msra.mxu0 %v174
    %338 = vmatpush.msra.mxu0 %v173
    %339 = vmatpush.msra.mxu0 %v172
    %340 = vmatpush.msra.mxu0 %v171
    %341 = vmatpush.msra.mxu0 %v170
    %342 = vmatmul.f32.gmra.mxu0 %v72
    %v343 = vpop.f32.mrf.mxu0
    %v344 = vadd.f32 %v324, %v343
    %345 = vdwg.mxu0
    %346 = vmatpush.msra.mxu0 %v201
    %347 = vmatpush.msra.mxu0 %v200
    %348 = vmatpush.msra.mxu0 %v199
    %349 = vmatpush.msra.mxu0 %v198
    %350 = vmatpush.msra.mxu0 %v197
    %351 = vmatpush.msra.mxu0 %v196
    %352 = vmatpush.msra.mxu0 %v195
    %353 = vmatpush.msra.mxu0 %v194
    %354 = vmatpush.msra.mxu0 %v193
    %355 = vmatpush.msra.mxu0 %v192
    %356 = vmatpush.msra.mxu0 %v191
    %357 = vmatpush.msra.mxu0 %v190
    %358 = vmatpush.msra.mxu0 %v189
    %359 = vmatpush.msra.mxu0 %v188
    %360 = vmatpush.msra.mxu0 %v187
    %361 = vmatpush.msra.mxu0 %v186
    %362 = vmatmul.f32.gmra.mxu0 %v73
    %v363 = vpop.f32.mrf.mxu0
    %v364 = vadd.f32 %v344, %v363
    %365 = vdwg.mxu0
    %v366 = vmax.f32 %v364, 0.0
    %v367 = vld [vmem:[#allocation7] sm:$0xff]
    %v368 = vld [vmem:[#allocation7 + $0x8] sm:$0xff]
    %v369 = vld [vmem:[#allocation7 + $0x10] sm:$0xff]
    %v370 = vld [vmem:[#allocation7 + $0x18] sm:$0xff]
    %v371 = vld [vmem:[#allocation7 + $0x20] sm:$0xff]
    %v372 = vld [vmem:[#allocation7 + $0x28] sm:$0xff]
    %v373 = vld [vmem:[#allocation7 + $0x30] sm:$0xff]
    %v374 = vld [vmem:[#allocation7 + $0x38] sm:$0xff]
    %v375 = vld [vmem:[#allocation7 + $0x40] sm:$0xff]
    %v376 = vld [vmem:[#allocation7 + $0x48] sm:$0xff]
    %v377 = vld [vmem:[#allocation7 + $0x50] sm:$0xff]
    %v378 = vld [vmem:[#allocation7 + $0x58] sm:$0xff]
    %v379 = vld [vmem:[#allocation7 + $0x60] sm:$0xff]
    %v380 = vld [vmem:[#allocation7 + $0x68] sm:$0xff]
    %v381 = vld [vmem:[#allocation7 + $0x70] sm:$0xff]
    %v382 = vld [vmem:[#allocation7 + $0x78] sm:$0xff]
    %v383 = vld [vmem:[%s4] sm:$0x1]
    %v385 = vperm.slane %v383, 0
    %387 = vmatpush.msra.mxu0 %v382
    %388 = vmatpush.msra.mxu0 %v381
    %389 = vmatpush.msra.mxu0 %v380
    %390 = vmatpush.msra.mxu0 %v379
    %391 = vmatpush.msra.mxu0 %v378
    %392 = vmatpush.msra.mxu0 %v377
    %393 = vmatpush.msra.mxu0 %v376
    %394 = vmatpush.msra.mxu0 %v375
    %395 = vmatpush.msra.mxu0 %v374
    %396 = vmatpush.msra.mxu0 %v373
    %397 = vmatpush.msra.mxu0 %v372
    %398 = vmatpush.msra.mxu0 %v371
    %399 = vmatpush.msra.mxu0 %v370
    %400 = vmatpush.msra.mxu0 %v369
    %401 = vmatpush.msra.mxu0 %v368
    %402 = vmatpush.msra.mxu0 %v367
    %403 = vmatmul.f32.gmra.mxu0 %v366
    %v404 = vpop.f32.mrf.mxu0
    %v405 = vadd.f32 %v385, %v404
    %406 = vdwg.mxu0
    %407 = vst [vmem:[#allocation8] sm:$0xff] %v405
    // Predicated region
    $region34: #{tpu_custom_call.1} parent=1 // pred_check
      _
    $region35: #{tpu_custom_call.1} parent=1 // pred_check_branch
      %409 = sbr.rel (0) target = $region37
    $region36: #{tpu_custom_call.1} parent=1 // pred_region
      %411 = vsyncadd [#allocation4], 0
      %s413 = sshll.u32 [#allocation8], 4
      %s414 = int_to_ptr.vmem [resolvable:$true] %s413
      %s415 = sshll.u32 %s5, 4
      %s416 = int_to_ptr.hbm [resolvable:$true] %s415
      %418 = dma.vmem_to_hbm [thread:$0]  %s414, 128, %s416, [#allocation4]
    $region37: #{tpu_custom_call.1} parent=1 // pred_fallthru
      _
    // Predicated region
    $region38: #{tpu_custom_call.1} parent=1 // pred_check
      _
    $region39: #{tpu_custom_call.1} parent=1 // pred_check_branch
      %420 = sbr.rel (0) target = $region41
    $region40: #{tpu_custom_call.1} parent=1 // pred_region
      %422 = dma.done [#allocation4], 128
    $region41: #{tpu_custom_call.1} parent=1 // pred_fallthru
      _
    %423 = vsyncpa [#allocation3], 1
    %424 = vsyncpa [#allocation6], 1
    %425 = vsyncpa [#allocation4], 1

</llo_original>
